<compile_context>
chip_gen: v6e
topology: v6e:2x2x1
jax: 0.10.0
libtpu: 0.0.40
codegen_flags: <defaults>
</compile_context>

<pallas_src>
import functools
import math

import jax
import jax.numpy as jnp
from jax import lax
from jax.experimental import pallas as pl
from jax.experimental.pallas import tpu as pltpu


def _round_up(v: int, m: int) -> int:
    return ((v + m - 1) // m) * m


# ----------------------------------------------------------------------------
# Pallas kernel: full forward pass on one graph (all tensors resident in VMEM).
# ----------------------------------------------------------------------------
def _gasnn_kernel(x_ref, adj_ref, emb_wT_ref, emb_b_ref,
                  wcat_ref, ro_wT_ref, ro_b_ref, out_ref,
                  *, num_layers: int, epsilon: float, hidden: int, unroll: bool):
    # Embedding (one-off, f32): x = x @ emb_W.T + emb_b
    x = jnp.dot(x_ref[...], emb_wT_ref[...],
                preferred_element_type=jnp.float32) + emb_b_ref[...]

    adj = adj_ref[...]      # (Np, Np) bf16 dense adjacency, A[dst, src] = 1 (exact in bf16)
    wcat = wcat_ref[...]    # (Hp, 2*Hp) bf16 = [ (W - W.T - gamma*I).T | lin.weight.T ]

    # AntiSymmetricConv with num_iters = num_layers (weight sharing).
    def body(_, x_f32):
        # One fused, lane-wide weight matmul per iteration (bf16 in, f32 accumulate).
        z = jnp.dot(x_f32.astype(jnp.bfloat16), wcat,
                    preferred_element_type=jnp.float32)               # (Np, 2*Hp)
        self_term = z[:, :hidden]                                     # x @ antisymmetric_W.T
        neigh = jnp.dot(adj, z[:, hidden:].astype(jnp.bfloat16),      # propagate / sum-aggr
                        preferred_element_type=jnp.float32)
        conv = self_term + neigh
        # Recurrence state and update stay in f32 (activ_fun='tanh', bias=False).
        return x_f32 + epsilon * jnp.tanh(conv)

    x = lax.fori_loop(0, num_layers, body, x, unroll=unroll)

    # Readout (one-off, f32, lane-dense 128-wide store): out = x @ ro_W.T + ro_b
    out = jnp.dot(x, ro_wT_ref[...], preferred_element_type=jnp.float32) + ro_b_ref[...]
    out_ref[...] = out.astype(out_ref.dtype)


# ----------------------------------------------------------------------------
# Wrapper: padding / parameter glue + pallas_call
# ----------------------------------------------------------------------------
def graph_antisymmetric_nn(x, edge_index, params, *, num_layers, epsilon, gamma):
    """x: (N, input_dim) f32; edge_index: (2, E) int32 [src; dst]."""
    N, in_dim = x.shape
    emb_w, emb_b = params["emb_w"], params["emb_b"]
    W, lin_w = params["W"], params["lin_w"]
    ro_w, ro_b = params["ro_w"], params["ro_b"]
    H = W.shape[0]
    out_dim = ro_w.shape[0]

    # Hardware-friendly padded sizes.
    N_pad = _round_up(N, 8)          # sublane multiple
    IN_pad = _round_up(in_dim, 128)  # lane multiple
    H_pad = _round_up(H, 128)        # lane multiple
    OUT_pad = _round_up(out_dim, 128)  # lane-dense output store

    # Node features, zero-padded (padded nodes / padded features contribute nothing).
    x_p = jnp.zeros((N_pad, IN_pad), jnp.float32).at[:N, :in_dim].set(x)

    # Dense adjacency A[dst, src] = 1.0 (edge_weight is None); padded nodes have no edges.
    # 0/1 (and small duplicate-edge counts) are exact in bf16.
    src, dst = edge_index[0], edge_index[1]
    adj = (jnp.zeros((N_pad, N_pad), jnp.float32)
           .at[dst, src].add(1.0)
           .astype(jnp.bfloat16))

    # Anti-symmetric matrix + fused per-iteration weight:
    #   z = x @ [wanti_T | lin_wT]  ->  conv = z[:, :H] + A @ z[:, H:]
    wanti = W - W.T - gamma * jnp.eye(H, dtype=W.dtype)
    wanti_T_p = jnp.zeros((H_pad, H_pad), jnp.float32).at[:H, :H].set(wanti.T)
    lin_wT_p = jnp.zeros((H_pad, H_pad), jnp.float32).at[:H, :H].set(lin_w.T)
    wcat = jnp.concatenate([wanti_T_p, lin_wT_p], axis=1).astype(jnp.bfloat16)  # (Hp, 2*Hp)

    emb_wT_p = jnp.zeros((IN_pad, H_pad), jnp.float32).at[:in_dim, :H].set(emb_w.T)
    emb_b_p = jnp.zeros((1, H_pad), jnp.float32).at[0, :H].set(emb_b)

    ro_wT_p = jnp.zeros((H_pad, OUT_pad), jnp.float32).at[:H, :out_dim].set(ro_w.T)
    ro_b_p = jnp.zeros((1, OUT_pad), jnp.float32).at[0, :out_dim].set(ro_b)

    kernel = functools.partial(_gasnn_kernel,
                               num_layers=num_layers,
                               epsilon=epsilon,
                               hidden=H_pad,
                               unroll=(num_layers <= 8))
    vmem = pl.BlockSpec(memory_space=pltpu.MemorySpace.VMEM)

    out_p = pl.pallas_call(
        kernel,
        out_shape=jax.ShapeDtypeStruct((N_pad, OUT_pad), jnp.float32),
        in_specs=[vmem] * 7,
        out_specs=vmem,
        compiler_params=pltpu.CompilerParams(vmem_limit_bytes=32 * 1024 * 1024),
    )(x_p, adj, emb_wT_p, emb_b_p, wcat, ro_wT_p, ro_b_p)

    # Strip node / output-channel padding.
    return out_p[:N, :out_dim]


# ----------------------------------------------------------------------------
# Pure-JAX f32 reference (mirrors the PyTorch forward exactly)
# ----------------------------------------------------------------------------
def reference(x, edge_index, params, *, num_layers, epsilon, gamma):
    emb_w, emb_b, W, lin_w, ro_w, ro_b = (
        params["emb_w"], params["emb_b"], params["W"],
        params["lin_w"], params["ro_w"], params["ro_b"],
    )
    H = W.shape[0]
    x = x @ emb_w.T + emb_b
    wanti = W - W.T - gamma * jnp.eye(H, dtype=W.dtype)
    src, dst = edge_index[0], edge_index[1]
    for _ in range(num_layers):
        neigh = x @ lin_w.T
        agg = jnp.zeros_like(neigh).at[dst].add(neigh[src])
        conv = x @ wanti.T + agg
        x = x + epsilon * jnp.tanh(conv)
    return x @ ro_w.T + ro_b


# ----------------------------------------------------------------------------
# Main
# ----------------------------------------------------------------------------
if __name__ == "__main__":
    # Small shapes consistent with the module.
    N_NODES = 8
    INPUT_DIM = 6
    HIDDEN_DIM = 32
    OUTPUT_DIM = 5
    NUM_LAYERS = 3
    EPSILON = 0.1
    GAMMA = 0.1

    key = jax.random.PRNGKey(0)
    k = jax.random.split(key, 8)

    # Deterministic parameter init (kaiming-uniform-style bounds; synthetic, not a checkpoint).
    def unif(rng, shape, bound):
        return jax.random.uniform(rng, shape, jnp.float32, -bound, bound)

    params = {
        "emb_w": unif(k[0], (HIDDEN_DIM, INPUT_DIM), 1.0 / math.sqrt(INPUT_DIM)),
        "emb_b": unif(k[1], (HIDDEN_DIM,), 1.0 / math.sqrt(INPUT_DIM)),
        "W":     unif(k[2], (HIDDEN_DIM, HIDDEN_DIM), 1.0 / math.sqrt(HIDDEN_DIM)),
        "lin_w": unif(k[3], (HIDDEN_DIM, HIDDEN_DIM), 1.0 / math.sqrt(HIDDEN_DIM)),
        "ro_w":  unif(k[4], (OUTPUT_DIM, HIDDEN_DIM), 1.0 / math.sqrt(HIDDEN_DIM)),
        "ro_b":  unif(k[5], (OUTPUT_DIM,), 1.0 / math.sqrt(HIDDEN_DIM)),
    }

    # Node features.
    x = jax.random.normal(k[6], (N_NODES, INPUT_DIM), jnp.float32)

    # Small undirected ring graph: edges in both directions.
    src = jnp.arange(N_NODES, dtype=jnp.int32)
    dst = (src + 1) % N_NODES
    edge_index = jnp.stack([jnp.concatenate([src, dst]),
                            jnp.concatenate([dst, src])], axis=0)   # (2, 2N)

    out = graph_antisymmetric_nn(x, edge_index, params,
                                 num_layers=NUM_LAYERS, epsilon=EPSILON, gamma=GAMMA)
    out = jax.block_until_ready(out)

    ref = reference(x, edge_index, params,
                    num_layers=NUM_LAYERS, epsilon=EPSILON, gamma=GAMMA)
    assert out.shape == (N_NODES, OUTPUT_DIM)
    # Tolerance loosened slightly vs pure-f32: iteration matmuls use bf16 inputs
    # (f32 accumulation, f32 state), per the performance guidance.
    assert jnp.allclose(out, ref, atol=2e-2, rtol=2e-2), "mismatch vs pure-JAX reference"

    print("KERNEL_OK")
</pallas_src>

<mosaic_0001>
module attributes {stable_mosaic.version = 11 : i64} {
  func.func @_gasnn_kernel(%arg0: memref<8x128xf32, #tpu.memory_space<vmem>>, %arg1: memref<8x8xbf16, #tpu.memory_space<vmem>>, %arg2: memref<128x128xf32, #tpu.memory_space<vmem>>, %arg3: memref<1x128xf32, #tpu.memory_space<vmem>>, %arg4: memref<128x256xbf16, #tpu.memory_space<vmem>>, %arg5: memref<128x128xf32, #tpu.memory_space<vmem>>, %arg6: memref<1x128xf32, #tpu.memory_space<vmem>>, %arg7: memref<8x128xf32, #tpu.memory_space<vmem>>) attributes {dimension_semantics = [], scalar_prefetch = 0 : i64, scratch_operands = 0 : i64, tpu.core_type = #tpu.core_type<tc>} {
    %c0 = arith.constant 0 : index
    %c0_0 = arith.constant 0 : index
    %0 = vector.load %arg0[%c0, %c0_0] : memref<8x128xf32, #tpu.memory_space<vmem>>, vector<8x128xf32>
    %c0_1 = arith.constant 0 : index
    %c0_2 = arith.constant 0 : index
    %1 = vector.load %arg2[%c0_1, %c0_2] : memref<128x128xf32, #tpu.memory_space<vmem>>, vector<128x128xf32>
    %cst = arith.constant dense<0.000000e+00> : vector<8x128xf32>
    %2 = tpu.matmul %0, %1, %cst {dimension_numbers = #tpu.dot_dimension_numbers<[1], [0], [0], [1], [0, 0, 1, 1], [], []>} : vector<8x128xf32>, vector<128x128xf32>, vector<8x128xf32> -> vector<8x128xf32>
    %c0_3 = arith.constant 0 : index
    %c0_4 = arith.constant 0 : index
    %3 = vector.load %arg3[%c0_3, %c0_4] : memref<1x128xf32, #tpu.memory_space<vmem>>, vector<1x128xf32>
    %4 = vector.broadcast %3 : vector<1x128xf32> to vector<8x128xf32>
    %5 = arith.addf %2, %4 : vector<8x128xf32>
    %c0_5 = arith.constant 0 : index
    %c0_6 = arith.constant 0 : index
    %6 = vector.load %arg1[%c0_5, %c0_6] : memref<8x8xbf16, #tpu.memory_space<vmem>>, vector<8x8xbf16>
    %c0_7 = arith.constant 0 : index
    %c0_8 = arith.constant 0 : index
    %7 = vector.load %arg4[%c0_7, %c0_8] : memref<128x256xbf16, #tpu.memory_space<vmem>>, vector<128x256xbf16>
    %c0_i32 = arith.constant 0 : i32
    %8 = arith.truncf %5 : vector<8x128xf32> to vector<8x128xbf16>
    %cst_9 = arith.constant dense<0.000000e+00> : vector<8x256xf32>
    %9 = tpu.matmul %8, %7, %cst_9 {dimension_numbers = #tpu.dot_dimension_numbers<[1], [0], [0], [1], [0, 0, 1, 1], [], []>} : vector<8x128xbf16>, vector<128x256xbf16>, vector<8x256xf32> -> vector<8x256xf32>
    %10 = vector.extract_strided_slice %9 {offsets = [0, 0], sizes = [8, 128], strides = [1, 1]} : vector<8x256xf32> to vector<8x128xf32>
    %11 = vector.extract_strided_slice %9 {offsets = [0, 128], sizes = [8, 128], strides = [1, 1]} : vector<8x256xf32> to vector<8x128xf32>
    %12 = arith.truncf %11 : vector<8x128xf32> to vector<8x128xbf16>
    %cst_10 = arith.constant dense<0.000000e+00> : vector<8x128xf32>
    %13 = tpu.matmul %6, %12, %cst_10 {dimension_numbers = #tpu.dot_dimension_numbers<[1], [0], [0], [1], [0, 0, 1, 1], [], []>} : vector<8x8xbf16>, vector<8x128xbf16>, vector<8x128xf32> -> vector<8x128xf32>
    %14 = arith.addf %10, %13 : vector<8x128xf32>
    %15 = math.tanh %14 : vector<8x128xf32>
    %cst_11 = arith.constant 1.000000e-01 : f32
    %16 = vector.broadcast %cst_11 : f32 to vector<8x128xf32>
    %17 = arith.mulf %16, %15 : vector<8x128xf32>
    %18 = arith.addf %5, %17 : vector<8x128xf32>
    %c1_i32 = arith.constant 1 : i32
    %19 = arith.truncf %18 : vector<8x128xf32> to vector<8x128xbf16>
    %cst_12 = arith.constant dense<0.000000e+00> : vector<8x256xf32>
    %20 = tpu.matmul %19, %7, %cst_12 {dimension_numbers = #tpu.dot_dimension_numbers<[1], [0], [0], [1], [0, 0, 1, 1], [], []>} : vector<8x128xbf16>, vector<128x256xbf16>, vector<8x256xf32> -> vector<8x256xf32>
    %21 = vector.extract_strided_slice %20 {offsets = [0, 0], sizes = [8, 128], strides = [1, 1]} : vector<8x256xf32> to vector<8x128xf32>
    %22 = vector.extract_strided_slice %20 {offsets = [0, 128], sizes = [8, 128], strides = [1, 1]} : vector<8x256xf32> to vector<8x128xf32>
    %23 = arith.truncf %22 : vector<8x128xf32> to vector<8x128xbf16>
    %cst_13 = arith.constant dense<0.000000e+00> : vector<8x128xf32>
    %24 = tpu.matmul %6, %23, %cst_13 {dimension_numbers = #tpu.dot_dimension_numbers<[1], [0], [0], [1], [0, 0, 1, 1], [], []>} : vector<8x8xbf16>, vector<8x128xbf16>, vector<8x128xf32> -> vector<8x128xf32>
    %25 = arith.addf %21, %24 : vector<8x128xf32>
    %26 = math.tanh %25 : vector<8x128xf32>
    %cst_14 = arith.constant 1.000000e-01 : f32
    %27 = vector.broadcast %cst_14 : f32 to vector<8x128xf32>
    %28 = arith.mulf %27, %26 : vector<8x128xf32>
    %29 = arith.addf %18, %28 : vector<8x128xf32>
    %c2_i32 = arith.constant 2 : i32
    %30 = arith.truncf %29 : vector<8x128xf32> to vector<8x128xbf16>
    %cst_15 = arith.constant dense<0.000000e+00> : vector<8x256xf32>
    %31 = tpu.matmul %30, %7, %cst_15 {dimension_numbers = #tpu.dot_dimension_numbers<[1], [0], [0], [1], [0, 0, 1, 1], [], []>} : vector<8x128xbf16>, vector<128x256xbf16>, vector<8x256xf32> -> vector<8x256xf32>
    %32 = vector.extract_strided_slice %31 {offsets = [0, 0], sizes = [8, 128], strides = [1, 1]} : vector<8x256xf32> to vector<8x128xf32>
    %33 = vector.extract_strided_slice %31 {offsets = [0, 128], sizes = [8, 128], strides = [1, 1]} : vector<8x256xf32> to vector<8x128xf32>
    %34 = arith.truncf %33 : vector<8x128xf32> to vector<8x128xbf16>
    %cst_16 = arith.constant dense<0.000000e+00> : vector<8x128xf32>
    %35 = tpu.matmul %6, %34, %cst_16 {dimension_numbers = #tpu.dot_dimension_numbers<[1], [0], [0], [1], [0, 0, 1, 1], [], []>} : vector<8x8xbf16>, vector<8x128xbf16>, vector<8x128xf32> -> vector<8x128xf32>
    %36 = arith.addf %32, %35 : vector<8x128xf32>
    %37 = math.tanh %36 : vector<8x128xf32>
    %cst_17 = arith.constant 1.000000e-01 : f32
    %38 = vector.broadcast %cst_17 : f32 to vector<8x128xf32>
    %39 = arith.mulf %38, %37 : vector<8x128xf32>
    %40 = arith.addf %29, %39 : vector<8x128xf32>
    %c0_18 = arith.constant 0 : index
    %c0_19 = arith.constant 0 : index
    %41 = vector.load %arg5[%c0_18, %c0_19] : memref<128x128xf32, #tpu.memory_space<vmem>>, vector<128x128xf32>
    %cst_20 = arith.constant dense<0.000000e+00> : vector<8x128xf32>
    %42 = tpu.matmul %40, %41, %cst_20 {dimension_numbers = #tpu.dot_dimension_numbers<[1], [0], [0], [1], [0, 0, 1, 1], [], []>} : vector<8x128xf32>, vector<128x128xf32>, vector<8x128xf32> -> vector<8x128xf32>
    %c0_21 = arith.constant 0 : index
    %c0_22 = arith.constant 0 : index
    %43 = vector.load %arg6[%c0_21, %c0_22] : memref<1x128xf32, #tpu.memory_space<vmem>>, vector<1x128xf32>
    %44 = vector.broadcast %43 : vector<1x128xf32> to vector<8x128xf32>
    %45 = arith.addf %42, %44 : vector<8x128xf32>
    %c0_23 = arith.constant 0 : index
    %c0_24 = arith.constant 0 : index
    %46 = vector.load %arg7[%c0_23, %c0_24] : memref<8x128xf32, #tpu.memory_space<vmem>>, vector<8x128xf32>
    tpu.vector_store %arg7[%c0_23, %c0_24], %45 {strides = array<i32>} : memref<8x128xf32, #tpu.memory_space<vmem>>, vector<8x128xf32>,
    return
  }
}

</mosaic_0001>

<llo_original>
// kernel: tpu_custom_call.1
$region0: #{tpu_custom_call.1}
  #allocation0 [shape = 'u32[]', space=smem, size = 0x4, offset = 0x4, fixed_abs, tag = 'smem constant byte address 0x4 - core index']
  #allocation1 [shape = 'u32[144,128]{1,0:T(1,128)}', space=vmem, size = 0x12000, scoped, tag = 'internal scratch']
  %s0 = inlined_call_operand.hbm [shape: f32[8,128], index: 0, kind: input, shape index: {}]
  %s1 = inlined_call_operand.hbm [shape: bf16[8,8], index: 1, kind: input, shape index: {}]
  %s2 = inlined_call_operand.hbm [shape: f32[128,128], index: 2, kind: input, shape index: {}]
  %s3 = inlined_call_operand.vmem [shape: f32[1,128], index: 3, kind: input, shape index: {}]
  %s4 = inlined_call_operand.hbm [shape: bf16[128,256], index: 4, kind: input, shape index: {}]
  %s5 = inlined_call_operand.hbm [shape: f32[128,128], index: 5, kind: input, shape index: {}]
  %s6 = inlined_call_operand.vmem [shape: f32[1,128], index: 6, kind: input, shape index: {}]
  %s7 = inlined_call_operand.hbm [shape: f32[8,128], index: 7, kind: output, shape index: {}]
  %s8 = sld [smem:[#allocation0]]
  $region58: #{tpu_custom_call.1} parent=0
    _
  %s10 = ssub.s32 1, %s8
  %s11 = scalar_select 0, %s10, %s8
  $region1: #{tpu_custom_call.1} parent=0
    #allocation2 [shape = 'u8[4096]{0}', space=vmem, size = 0x1000, scoped, tag = 'input window, operand 0, single buffered']
    #allocation3 [shape = 's32[1]{0}', space=sflag, size = 0x4, scoped, tag = 'scoped memory for tpu_custom_call.1']
    #allocation4 [shape = 's32[1]{0}', space=sflag, size = 0x4, scoped, tag = 'scoped memory for tpu_custom_call.1']
    #allocation5 [shape = 'u8[2048]{0}', space=vmem, size = 0x800, scoped, tag = 'input window, operand 1, single buffered']
    #allocation6 [shape = 's32[1]{0}', space=sflag, size = 0x4, scoped, tag = 'scoped memory for tpu_custom_call.1']
    #allocation7 [shape = 'u8[65536]{0}', space=vmem, size = 0x10000, scoped, tag = 'input window, operand 2, single buffered']
    #allocation8 [shape = 'u8[65536]{0}', space=vmem, size = 0x10000, scoped, tag = 'input window, operand 4, single buffered']
    #allocation9 [shape = 's32[1]{0}', space=sflag, size = 0x4, scoped, tag = 'scoped memory for tpu_custom_call.1']
    #allocation10 [shape = 'u8[65536]{0}', space=vmem, size = 0x10000, scoped, tag = 'input window, operand 5, single buffered']
    #allocation11 [shape = 'u8[4096]{0}', space=vmem, size = 0x1000, scoped, tag = 'output window, operand 0, single buffered']
    %12 = vsyncpa [#allocation3], 0
    %13 = vsyncpa [#allocation6], 0
    %14 = vsyncpa [#allocation9], 0
    %15 = vsyncpa [#allocation4], 0
    // Predicated region
    $region2: #{tpu_custom_call.1} parent=1 // pred_check
      _
    $region3: #{tpu_custom_call.1} parent=1 // pred_check_branch
      %17 = sbr.rel (0) target = $region5
    $region4: #{tpu_custom_call.1} parent=1 // pred_region
      %s19 = ssub.s32 128, 128
      %20 = vsyncadd [#allocation3], %s19
      %s22 = sshll.u32 [#allocation2], 4
      %s23 = int_to_ptr.vmem [resolvable:$true] %s22
      %25 = dma.hbm_to_vmem [thread:$0]  %s0, 128, %s23, [#allocation3]
    $region5: #{tpu_custom_call.1} parent=1 // pred_fallthru
      _
    // Predicated region
    $region6: #{tpu_custom_call.1} parent=1 // pred_check
      _
    $region7: #{tpu_custom_call.1} parent=1 // pred_check_branch
      %27 = sbr.rel (0) target = $region9
    $region8: #{tpu_custom_call.1} parent=1 // pred_region
      %s29 = ssub.s32 64, 64
      %30 = vsyncadd [#allocation6], %s29
      %s32 = sshll.u32 [#allocation5], 4
      %s33 = int_to_ptr.vmem [resolvable:$true] %s32
      %35 = dma.hbm_to_vmem [thread:$0]  %s1, 64, %s33, [#allocation6]
    $region9: #{tpu_custom_call.1} parent=1 // pred_fallthru
      _
    // Predicated region
    $region10: #{tpu_custom_call.1} parent=1 // pred_check
      _
    $region11: #{tpu_custom_call.1} parent=1 // pred_check_branch
      %37 = sbr.rel (0) target = $region13
    $region12: #{tpu_custom_call.1} parent=1 // pred_region
      %s39 = ssub.s32 2048, 2048
      %40 = vsyncadd [#allocation6], %s39
      %s41 = sshll.u32 [#allocation7], 4
      %s42 = int_to_ptr.vmem [resolvable:$true] %s41
      %47 = dma.hbm_to_vmem [thread:$0]  %s2, 2048, %s42, [#allocation6], 128, 128, 8
    $region13: #{tpu_custom_call.1} parent=1 // pred_fallthru
      _
    // Predicated region
    $region14: #{tpu_custom_call.1} parent=1 // pred_check
      _
    $region15: #{tpu_custom_call.1} parent=1 // pred_check_branch
      %49 = sbr.rel (0) target = $region17
    $region16: #{tpu_custom_call.1} parent=1 // pred_region
      _
    $region17: #{tpu_custom_call.1} parent=1 // pred_fallthru
      _
    // Predicated region
    $region18: #{tpu_custom_call.1} parent=1 // pred_check
      _
    $region19: #{tpu_custom_call.1} parent=1 // pred_check_branch
      %51 = sbr.rel (0) target = $region21
    $region20: #{tpu_custom_call.1} parent=1 // pred_region
      %s53 = ssub.s32 2048, 2048
      %54 = vsyncadd [#allocation9], %s53
      %s55 = sshll.u32 [#allocation8], 4
      %s56 = int_to_ptr.vmem [resolvable:$true] %s55
      %61 = dma.hbm_to_vmem [thread:$0]  %s4, 2048, %s56, [#allocation9], 128, 128, 8
    $region21: #{tpu_custom_call.1} parent=1 // pred_fallthru
      _
    // Predicated region
    $region22: #{tpu_custom_call.1} parent=1 // pred_check
      _
    $region23: #{tpu_custom_call.1} parent=1 // pred_check_branch
      %63 = sbr.rel (0) target = $region25
    $region24: #{tpu_custom_call.1} parent=1 // pred_region
      %s65 = ssub.s32 2048, 2048
      %66 = vsyncadd [#allocation9], %s65
      %s67 = sshll.u32 [#allocation10], 4
      %s68 = int_to_ptr.vmem [resolvable:$true] %s67
      %73 = dma.hbm_to_vmem [thread:$0]  %s5, 2048, %s68, [#allocation9], 128, 128, 8
    $region25: #{tpu_custom_call.1} parent=1 // pred_fallthru
      _
    // Predicated region
    $region26: #{tpu_custom_call.1} parent=1 // pred_check
      _
    $region27: #{tpu_custom_call.1} parent=1 // pred_check_branch
      %75 = sbr.rel (0) target = $region29
    $region28: #{tpu_custom_call.1} parent=1 // pred_region
      _
    $region29: #{tpu_custom_call.1} parent=1 // pred_fallthru
      _
    // Predicated region
    $region30: #{tpu_custom_call.1} parent=1 // pred_check
      _
    $region31: #{tpu_custom_call.1} parent=1 // pred_check_branch
      %77 = sbr.rel (0) target = $region33
    $region32: #{tpu_custom_call.1} parent=1 // pred_region
      %78 = dma.done [#allocation3], 128
    $region33: #{tpu_custom_call.1} parent=1 // pred_fallthru
      _
    // Predicated region
    $region34: #{tpu_custom_call.1} parent=1 // pred_check
      _
    $region35: #{tpu_custom_call.1} parent=1 // pred_check_branch
      %80 = sbr.rel (0) target = $region37
    $region36: #{tpu_custom_call.1} parent=1 // pred_region
      %81 = dma.done [#allocation6], 64
    $region37: #{tpu_custom_call.1} parent=1 // pred_fallthru
      _
    // Predicated region
    $region38: #{tpu_custom_call.1} parent=1 // pred_check
      _
    $region39: #{tpu_custom_call.1} parent=1 // pred_check_branch
      %83 = sbr.rel (0) target = $region41
    $region40: #{tpu_custom_call.1} parent=1 // pred_region
      %84 = dma.done [#allocation6], 2048
    $region41: #{tpu_custom_call.1} parent=1 // pred_fallthru
      _
    // Predicated region
    $region42: #{tpu_custom_call.1} parent=1 // pred_check
      _
    $region43: #{tpu_custom_call.1} parent=1 // pred_check_branch
      %86 = sbr.rel (0) target = $region45
    $region44: #{tpu_custom_call.1} parent=1 // pred_region
      %87 = dma.done [#allocation9], 2048
    $region45: #{tpu_custom_call.1} parent=1 // pred_fallthru
      _
    // Predicated region
    $region46: #{tpu_custom_call.1} parent=1 // pred_check
      _
    $region47: #{tpu_custom_call.1} parent=1 // pred_check_branch
      %89 = sbr.rel (0) target = $region49
    $region48: #{tpu_custom_call.1} parent=1 // pred_region
      %90 = dma.done [#allocation9], 2048
    $region49: #{tpu_custom_call.1} parent=1 // pred_fallthru
      _
    %v92 = vld [vmem:[#allocation2] sm:$0xff]
    %v93 = vld [vmem:[#allocation7] sm:$0xff]
    %v94 = vld [vmem:[#allocation7 + $0x8] sm:$0xff]
    %v95 = vld [vmem:[#allocation7 + $0x10] sm:$0xff]
    %v96 = vld [vmem:[#allocation7 + $0x18] sm:$0xff]
    %v97 = vld [vmem:[#allocation7 + $0x20] sm:$0xff]
    %v98 = vld [vmem:[#allocation7 + $0x28] sm:$0xff]
    %v99 = vld [vmem:[#allocation7 + $0x30] sm:$0xff]
    %v100 = vld [vmem:[#allocation7 + $0x38] sm:$0xff]
    %v101 = vld [vmem:[#allocation7 + $0x40] sm:$0xff]
    %v102 = vld [vmem:[#allocation7 + $0x48] sm:$0xff]
    %v103 = vld [vmem:[#allocation7 + $0x50] sm:$0xff]
    %v104 = vld [vmem:[#allocation7 + $0x58] sm:$0xff]
    %v105 = vld [vmem:[#allocation7 + $0x60] sm:$0xff]
    %v106 = vld [vmem:[#allocation7 + $0x68] sm:$0xff]
    %v107 = vld [vmem:[#allocation7 + $0x70] sm:$0xff]
    %v108 = vld [vmem:[#allocation7 + $0x78] sm:$0xff]
    %v109 = vld [vmem:[%s3] sm:$0x1]
    %v111 = vlaneseq
    %v112 = vshrl.u32 %v111, 7
    %v113 = vsub.s32 0, %v112
    %v114 = vrot.slane %v109, %v113
    %116 = vmatprep.subr.mxu0 0.0
    %117 = vmatpush1.msra.mxu0 %v108
    %118 = vmatprep.subr.mxu0 0.0
    %119 = vmatpush1.msra.mxu0 %v107
    %120 = vmatprep.subr.mxu0 0.0
    %121 = vmatpush1.msra.mxu0 %v106
    %122 = vmatprep.subr.mxu0 0.0
    %123 = vmatpush1.msra.mxu0 %v105
    %124 = vmatprep.subr.mxu0 0.0
    %125 = vmatpush1.msra.mxu0 %v104
    %126 = vmatprep.subr.mxu0 0.0
    %127 = vmatpush1.msra.mxu0 %v103
    %128 = vmatprep.subr.mxu0 0.0
    %129 = vmatpush1.msra.mxu0 %v102
    %130 = vmatprep.subr.mxu0 0.0
    %131 = vmatpush1.msra.mxu0 %v101
    %132 = vmatprep.subr.mxu0 0.0
    %133 = vmatpush1.msra.mxu0 %v100
    %134 = vmatprep.subr.mxu0 0.0
    %135 = vmatpush1.msra.mxu0 %v99
    %136 = vmatprep.subr.mxu0 0.0
    %137 = vmatpush1.msra.mxu0 %v98
    %138 = vmatprep.subr.mxu0 0.0
    %139 = vmatpush1.msra.mxu0 %v97
    %140 = vmatprep.subr.mxu0 0.0
    %141 = vmatpush1.msra.mxu0 %v96
    %142 = vmatprep.subr.mxu0 0.0
    %143 = vmatpush1.msra.mxu0 %v95
    %144 = vmatprep.subr.mxu0 0.0
    %145 = vmatpush1.msra.mxu0 %v94
    %146 = vmatprep.subr.mxu0 0.0
    %147 = vmatpush1.msra.mxu0 %v93
    %148 = vmatprep.subr.mxu0 0.0
    %149 = vmatpush2.msra.mxu0 0.0
    %150 = vmatprep.subr.mxu0 0.0
    %151 = vmatpush2.msra.mxu0 0.0
    %152 = vmatprep.subr.mxu0 0.0
    %153 = vmatpush2.msra.mxu0 0.0
    %154 = vmatprep.subr.mxu0 0.0
    %155 = vmatpush2.msra.mxu0 0.0
    %156 = vmatprep.subr.mxu0 0.0
    %157 = vmatpush2.msra.mxu0 0.0
    %158 = vmatprep.subr.mxu0 0.0
    %159 = vmatpush2.msra.mxu0 0.0
    %160 = vmatprep.subr.mxu0 0.0
    %161 = vmatpush2.msra.mxu0 0.0
    %162 = vmatprep.subr.mxu0 0.0
    %163 = vmatpush2.msra.mxu0 0.0
    %164 = vmatprep.subr.mxu0 0.0
    %165 = vmatpush2.msra.mxu0 0.0
    %166 = vmatprep.subr.mxu0 0.0
    %167 = vmatpush2.msra.mxu0 0.0
    %168 = vmatprep.subr.mxu0 0.0
    %169 = vmatpush2.msra.mxu0 0.0
    %170 = vmatprep.subr.mxu0 0.0
    %171 = vmatpush2.msra.mxu0 0.0
    %172 = vmatprep.subr.mxu0 0.0
    %173 = vmatpush2.msra.mxu0 0.0
    %174 = vmatprep.subr.mxu0 0.0
    %175 = vmatpush2.msra.mxu0 0.0
    %176 = vmatprep.subr.mxu0 0.0
    %177 = vmatpush2.msra.mxu0 0.0
    %178 = vmatprep.subr.mxu0 0.0
    %179 = vmatpush2.msra.mxu0 0.0
    %180 = vmatprep.mubr.f32.mxu0 0.0
    %181 = vmatmul.mubr.f32.gmra.mxu0 %v92
    %v182 = vpop.f32.mrf.mxu0
    %v183 = vadd.f32 %v114, %v182
    %v184 = vpop.f32.mrf.mxu0
    %185 = vdwg.mxu0
    %v186 = vld [vmem:[#allocation5] sm:$0xf]
    %v187 = vld [vmem:[#allocation8] sm:$0xff]
    %v188 = vld [vmem:[#allocation8 + $0x8] sm:$0xff]
    %v189 = vld [vmem:[#allocation8 + $0x10] sm:$0xff]
    %v190 = vld [vmem:[#allocation8 + $0x18] sm:$0xff]
    %v191 = vld [vmem:[#allocation8 + $0x20] sm:$0xff]
    %v192 = vld [vmem:[#allocation8 + $0x28] sm:$0xff]
    %v193 = vld [vmem:[#allocation8 + $0x30] sm:$0xff]
    %v194 = vld [vmem:[#allocation8 + $0x38] sm:$0xff]
    %v195 = vld [vmem:[#allocation8 + $0x40] sm:$0xff]
    %v196 = vld [vmem:[#allocation8 + $0x48] sm:$0xff]
    %v197 = vld [vmem:[#allocation8 + $0x50] sm:$0xff]
    %v198 = vld [vmem:[#allocation8 + $0x58] sm:$0xff]
    %v199 = vld [vmem:[#allocation8 + $0x60] sm:$0xff]
    %v200 = vld [vmem:[#allocation8 + $0x68] sm:$0xff]
    %v201 = vld [vmem:[#allocation8 + $0x70] sm:$0xff]
    %v202 = vld [vmem:[#allocation8 + $0x78] sm:$0xff]
    %v203 = vpack.c.bf16 %v183, %v183
    %v220 = vunpack.c.l.b16 %v187
    %v221 = vunpack.c.h.b16 %v187
    %v222 = vunpack.c.l.b16 %v188
    %v223 = vunpack.c.h.b16 %v188
    %v224 = vunpack.c.l.b16 %v189
    %v225 = vunpack.c.h.b16 %v189
    %v226 = vunpack.c.l.b16 %v190
    %v227 = vunpack.c.h.b16 %v190
    %v228 = vunpack.c.l.b16 %v191
    %v229 = vunpack.c.h.b16 %v191
    %v230 = vunpack.c.l.b16 %v192
    %v231 = vunpack.c.h.b16 %v192
    %v232 = vunpack.c.l.b16 %v193
    %v233 = vunpack.c.h.b16 %v193
    %v234 = vunpack.c.l.b16 %v194
    %v235 = vunpack.c.h.b16 %v194
    %v236 = vunpack.c.l.b16 %v195
    %v237 = vunpack.c.h.b16 %v195
    %v238 = vunpack.c.l.b16 %v196
    %v239 = vunpack.c.h.b16 %v196
    %v240 = vunpack.c.l.b16 %v197
    %v241 = vunpack.c.h.b16 %v197
    %v242 = vunpack.c.l.b16 %v198
    %v243 = vunpack.c.h.b16 %v198
    %v244 = vunpack.c.l.b16 %v199
    %v245 = vunpack.c.h.b16 %v199
    %v246 = vunpack.c.l.b16 %v200
    %v247 = vunpack.c.h.b16 %v200
    %v248 = vunpack.c.l.b16 %v201
    %v249 = vunpack.c.h.b16 %v201
    %v250 = vunpack.c.l.b16 %v202
    %v251 = vunpack.c.h.b16 %v202
    %v252 = vpack.c.b16 %v222, %v220
    %v253 = vpack.c.b16 %v223, %v221
    %v254 = vpack.c.b16 %v226, %v224
    %v255 = vpack.c.b16 %v227, %v225
    %v256 = vpack.c.b16 %v230, %v228
    %v257 = vpack.c.b16 %v231, %v229
    %v258 = vpack.c.b16 %v234, %v232
    %v259 = vpack.c.b16 %v235, %v233
    %v260 = vpack.c.b16 %v238, %v236
    %v261 = vpack.c.b16 %v239, %v237
    %v262 = vpack.c.b16 %v242, %v240
    %v263 = vpack.c.b16 %v243, %v241
    %v264 = vpack.c.b16 %v246, %v244
    %v265 = vpack.c.b16 %v247, %v245
    %v266 = vpack.c.b16 %v250, %v248
    %v267 = vpack.c.b16 %v251, %v249
    %284 = vmatprep.subr.bf16.mxu0 %v267
    %285 = vmatpush1.bf16.msra.mxu0 %v266
    %286 = vmatprep.subr.bf16.mxu0 %v265
    %287 = vmatpush1.bf16.msra.mxu0 %v264
    %288 = vmatprep.subr.bf16.mxu0 %v263
    %289 = vmatpush1.bf16.msra.mxu0 %v262
    %290 = vmatprep.subr.bf16.mxu0 %v261
    %291 = vmatpush1.bf16.msra.mxu0 %v260
    %292 = vmatprep.subr.bf16.mxu0 %v259
    %293 = vmatpush1.bf16.msra.mxu0 %v258
    %294 = vmatprep.subr.bf16.mxu0 %v257
    %295 = vmatpush1.bf16.msra.mxu0 %v256
    %296 = vmatprep.subr.bf16.mxu0 %v255
    %297 = vmatpush1.bf16.msra.mxu0 %v254
    %298 = vmatprep.subr.bf16.mxu0 %v253
    %299 = vmatpush1.bf16.msra.mxu0 %v252
    %300 = vmatprep.subr.bf16.mxu0 0
    %301 = vmatpush2.bf16.msra.mxu0 0
    %302 = vmatprep.subr.bf16.mxu0 0
    %303 = vmatpush2.bf16.msra.mxu0 0
    %304 = vmatprep.subr.bf16.mxu0 0
    %305 = vmatpush2.bf16.msra.mxu0 0
    %306 = vmatprep.subr.bf16.mxu0 0
    %307 = vmatpush2.bf16.msra.mxu0 0
    %308 = vmatprep.subr.bf16.mxu0 0
    %309 = vmatpush2.bf16.msra.mxu0 0
    %310 = vmatprep.subr.bf16.mxu0 0
    %311 = vmatpush2.bf16.msra.mxu0 0
    %312 = vmatprep.subr.bf16.mxu0 0
    %313 = vmatpush2.bf16.msra.mxu0 0
    %314 = vmatprep.subr.bf16.mxu0 0
    %315 = vmatpush2.bf16.msra.mxu0 0
    %316 = vmatprep.mubr.bf16.mxu0 0
    %317 = vmatmul.mubr.bf16.gmra.mxu0 %v203
    %v318 = vpop.f32.mrf.mxu0
    %v319 = vadd.f32 0.0, %v318
    %v320 = vpop.f32.mrf.mxu0
    %v321 = vadd.f32 0.0, %v320
    %v322 = vpop.f32.mrf.mxu0
    %v323 = vpop.f32.mrf.mxu0
    %324 = vdwg.mxu0
    %v325 = vpack.c.bf16 %v321, %v321
    %vm326 = vcmask 64512
    %v328 = vsel %vm326, %v186, 0
    %vm330 = vcmask 1043456
    %v332 = vsel %vm330, %v325, 0
    %334 = vmatprep.subr.bf16.mxu0 0
    %335 = vmatpush1.bf16.msra.mxu0 0
    %336 = vmatprep.subr.bf16.mxu0 0
    %337 = vmatpush1.bf16.msra.mxu0 0
    %338 = vmatprep.subr.bf16.mxu0 0
    %339 = vmatpush1.bf16.msra.mxu0 0
    %340 = vmatprep.subr.bf16.mxu0 0
    %341 = vmatpush1.bf16.msra.mxu0 0
    %342 = vmatprep.subr.bf16.mxu0 0
    %343 = vmatpush1.bf16.msra.mxu0 0
    %344 = vmatprep.subr.bf16.mxu0 0
    %345 = vmatpush1.bf16.msra.mxu0 0
    %346 = vmatprep.subr.bf16.mxu0 0
    %347 = vmatpush1.bf16.msra.mxu0 0
    %348 = vmatprep.subr.bf16.mxu0 0
    %349 = vmatpush1.bf16.msra.mxu0 %v332
    %350 = vmatprep.subr.bf16.mxu0 0
    %351 = vmatpush2.bf16.msra.mxu0 0
    %352 = vmatprep.subr.bf16.mxu0 0
    %353 = vmatpush2.bf16.msra.mxu0 0
    %354 = vmatprep.subr.bf16.mxu0 0
    %355 = vmatpush2.bf16.msra.mxu0 0
    %356 = vmatprep.subr.bf16.mxu0 0
    %357 = vmatpush2.bf16.msra.mxu0 0
    %358 = vmatprep.subr.bf16.mxu0 0
    %359 = vmatpush2.bf16.msra.mxu0 0
    %360 = vmatprep.subr.bf16.mxu0 0
    %361 = vmatpush2.bf16.msra.mxu0 0
    %362 = vmatprep.subr.bf16.mxu0 0
    %363 = vmatpush2.bf16.msra.mxu0 0
    %364 = vmatprep.subr.bf16.mxu0 0
    %365 = vmatpush2.bf16.msra.mxu0 0
    %366 = vmatprep.mubr.bf16.mxu0 0
    %367 = vmatmul.mubr.bf16.gmra.mxu0 %v328
    %v368 = vpop.f32.mrf.mxu0
    %v369 = vadd.f32 0.0, %v368
    %v370 = vpop.f32.mrf.mxu0
    %v371 = vpop.f32.mrf.mxu0
    %v372 = vpop.f32.mrf.mxu0
    %373 = vdwg.mxu0
    %v374 = vadd.f32 %v319, %v369
    %v375 = vtanh.pop %v374
    %v376 = vmul.f32 %v375, 0.1
    %v377 = vadd.f32 %v183, %v376
    %v378 = vpack.c.bf16 %v377, %v377
    %379 = vmatprep.subr.bf16.mxu0 %v267
    %380 = vmatpush1.bf16.msra.mxu0 %v266
    %381 = vmatprep.subr.bf16.mxu0 %v265
    %382 = vmatpush1.bf16.msra.mxu0 %v264
    %383 = vmatprep.subr.bf16.mxu0 %v263
    %384 = vmatpush1.bf16.msra.mxu0 %v262
    %385 = vmatprep.subr.bf16.mxu0 %v261
    %386 = vmatpush1.bf16.msra.mxu0 %v260
    %387 = vmatprep.subr.bf16.mxu0 %v259
    %388 = vmatpush1.bf16.msra.mxu0 %v258
    %389 = vmatprep.subr.bf16.mxu0 %v257
    %390 = vmatpush1.bf16.msra.mxu0 %v256
    %391 = vmatprep.subr.bf16.mxu0 %v255
    %392 = vmatpush1.bf16.msra.mxu0 %v254
    %393 = vmatprep.subr.bf16.mxu0 %v253
    %394 = vmatpush1.bf16.msra.mxu0 %v252
    %395 = vmatprep.subr.bf16.mxu0 0
    %396 = vmatpush2.bf16.msra.mxu0 0
    %397 = vmatprep.subr.bf16.mxu0 0
    %398 = vmatpush2.bf16.msra.mxu0 0
    %399 = vmatprep.subr.bf16.mxu0 0
    %400 = vmatpush2.bf16.msra.mxu0 0
    %401 = vmatprep.subr.bf16.mxu0 0
    %402 = vmatpush2.bf16.msra.mxu0 0
    %403 = vmatprep.subr.bf16.mxu0 0
    %404 = vmatpush2.bf16.msra.mxu0 0
    %405 = vmatprep.subr.bf16.mxu0 0
    %406 = vmatpush2.bf16.msra.mxu0 0
    %407 = vmatprep.subr.bf16.mxu0 0
    %408 = vmatpush2.bf16.msra.mxu0 0
    %409 = vmatprep.subr.bf16.mxu0 0
    %410 = vmatpush2.bf16.msra.mxu0 0
    %411 = vmatprep.mubr.bf16.mxu0 0
    %412 = vmatmul.mubr.bf16.gmra.mxu0 %v378
    %v413 = vpop.f32.mrf.mxu0
    %v414 = vadd.f32 0.0, %v413
    %v415 = vpop.f32.mrf.mxu0
    %v416 = vadd.f32 0.0, %v415
    %v417 = vpop.f32.mrf.mxu0
    %v418 = vpop.f32.mrf.mxu0
    %419 = vdwg.mxu0
    %v420 = vpack.c.bf16 %v416, %v416
    %v422 = vsel %vm330, %v420, 0
    %424 = vmatprep.subr.bf16.mxu0 0
    %425 = vmatpush1.bf16.msra.mxu0 0
    %426 = vmatprep.subr.bf16.mxu0 0
    %427 = vmatpush1.bf16.msra.mxu0 0
    %428 = vmatprep.subr.bf16.mxu0 0
    %429 = vmatpush1.bf16.msra.mxu0 0
    %430 = vmatprep.subr.bf16.mxu0 0
    %431 = vmatpush1.bf16.msra.mxu0 0
    %432 = vmatprep.subr.bf16.mxu0 0
    %433 = vmatpush1.bf16.msra.mxu0 0
    %434 = vmatprep.subr.bf16.mxu0 0
    %435 = vmatpush1.bf16.msra.mxu0 0
    %436 = vmatprep.subr.bf16.mxu0 0
    %437 = vmatpush1.bf16.msra.mxu0 0
    %438 = vmatprep.subr.bf16.mxu0 0
    %439 = vmatpush1.bf16.msra.mxu0 %v422
    %440 = vmatprep.subr.bf16.mxu0 0
    %441 = vmatpush2.bf16.msra.mxu0 0
    %442 = vmatprep.subr.bf16.mxu0 0
    %443 = vmatpush2.bf16.msra.mxu0 0
    %444 = vmatprep.subr.bf16.mxu0 0
    %445 = vmatpush2.bf16.msra.mxu0 0
    %446 = vmatprep.subr.bf16.mxu0 0
    %447 = vmatpush2.bf16.msra.mxu0 0
    %448 = vmatprep.subr.bf16.mxu0 0
    %449 = vmatpush2.bf16.msra.mxu0 0
    %450 = vmatprep.subr.bf16.mxu0 0
    %451 = vmatpush2.bf16.msra.mxu0 0
    %452 = vmatprep.subr.bf16.mxu0 0
    %453 = vmatpush2.bf16.msra.mxu0 0
    %454 = vmatprep.subr.bf16.mxu0 0
    %455 = vmatpush2.bf16.msra.mxu0 0
    %456 = vmatprep.mubr.bf16.mxu0 0
    %457 = vmatmul.mubr.bf16.gmra.mxu0 %v328
    %v458 = vpop.f32.mrf.mxu0
    %v459 = vadd.f32 0.0, %v458
    %v460 = vpop.f32.mrf.mxu0
    %v461 = vpop.f32.mrf.mxu0
    %v462 = vpop.f32.mrf.mxu0
    %463 = vdwg.mxu0
    %v464 = vadd.f32 %v414, %v459
    %v465 = vtanh.pop %v464
    %v466 = vmul.f32 %v465, 0.1
    %v467 = vadd.f32 %v377, %v466
    %v468 = vpack.c.bf16 %v467, %v467
    %469 = vmatprep.subr.bf16.mxu0 %v267
    %470 = vmatpush1.bf16.msra.mxu0 %v266
    %471 = vmatprep.subr.bf16.mxu0 %v265
    %472 = vmatpush1.bf16.msra.mxu0 %v264
    %473 = vmatprep.subr.bf16.mxu0 %v263
    %474 = vmatpush1.bf16.msra.mxu0 %v262
    %475 = vmatprep.subr.bf16.mxu0 %v261
    %476 = vmatpush1.bf16.msra.mxu0 %v260
    %477 = vmatprep.subr.bf16.mxu0 %v259
    %478 = vmatpush1.bf16.msra.mxu0 %v258
    %479 = vmatprep.subr.bf16.mxu0 %v257
    %480 = vmatpush1.bf16.msra.mxu0 %v256
    %481 = vmatprep.subr.bf16.mxu0 %v255
    %482 = vmatpush1.bf16.msra.mxu0 %v254
    %483 = vmatprep.subr.bf16.mxu0 %v253
    %484 = vmatpush1.bf16.msra.mxu0 %v252
    %485 = vmatprep.subr.bf16.mxu0 0
    %486 = vmatpush2.bf16.msra.mxu0 0
    %487 = vmatprep.subr.bf16.mxu0 0
    %488 = vmatpush2.bf16.msra.mxu0 0
    %489 = vmatprep.subr.bf16.mxu0 0
    %490 = vmatpush2.bf16.msra.mxu0 0
    %491 = vmatprep.subr.bf16.mxu0 0
    %492 = vmatpush2.bf16.msra.mxu0 0
    %493 = vmatprep.subr.bf16.mxu0 0
    %494 = vmatpush2.bf16.msra.mxu0 0
    %495 = vmatprep.subr.bf16.mxu0 0
    %496 = vmatpush2.bf16.msra.mxu0 0
    %497 = vmatprep.subr.bf16.mxu0 0
    %498 = vmatpush2.bf16.msra.mxu0 0
    %499 = vmatprep.subr.bf16.mxu0 0
    %500 = vmatpush2.bf16.msra.mxu0 0
    %501 = vmatprep.mubr.bf16.mxu0 0
    %502 = vmatmul.mubr.bf16.gmra.mxu0 %v468
    %v503 = vpop.f32.mrf.mxu0
    %v504 = vadd.f32 0.0, %v503
    %v505 = vpop.f32.mrf.mxu0
    %v506 = vadd.f32 0.0, %v505
    %v507 = vpop.f32.mrf.mxu0
    %v508 = vpop.f32.mrf.mxu0
    %509 = vdwg.mxu0
    %v510 = vpack.c.bf16 %v506, %v506
    %v512 = vsel %vm330, %v510, 0
    %514 = vmatprep.subr.bf16.mxu0 0
    %515 = vmatpush1.bf16.msra.mxu0 0
    %516 = vmatprep.subr.bf16.mxu0 0
    %517 = vmatpush1.bf16.msra.mxu0 0
    %518 = vmatprep.subr.bf16.mxu0 0
    %519 = vmatpush1.bf16.msra.mxu0 0
    %520 = vmatprep.subr.bf16.mxu0 0
    %521 = vmatpush1.bf16.msra.mxu0 0
    %522 = vmatprep.subr.bf16.mxu0 0
    %523 = vmatpush1.bf16.msra.mxu0 0
    %524 = vmatprep.subr.bf16.mxu0 0
    %525 = vmatpush1.bf16.msra.mxu0 0
    %526 = vmatprep.subr.bf16.mxu0 0
    %527 = vmatpush1.bf16.msra.mxu0 0
    %528 = vmatprep.subr.bf16.mxu0 0
    %529 = vmatpush1.bf16.msra.mxu0 %v512
    %530 = vmatprep.subr.bf16.mxu0 0
    %531 = vmatpush2.bf16.msra.mxu0 0
    %532 = vmatprep.subr.bf16.mxu0 0
    %533 = vmatpush2.bf16.msra.mxu0 0
    %534 = vmatprep.subr.bf16.mxu0 0
    %535 = vmatpush2.bf16.msra.mxu0 0
    %536 = vmatprep.subr.bf16.mxu0 0
    %537 = vmatpush2.bf16.msra.mxu0 0
    %538 = vmatprep.subr.bf16.mxu0 0
    %539 = vmatpush2.bf16.msra.mxu0 0
    %540 = vmatprep.subr.bf16.mxu0 0
    %541 = vmatpush2.bf16.msra.mxu0 0
    %542 = vmatprep.subr.bf16.mxu0 0
    %543 = vmatpush2.bf16.msra.mxu0 0
    %544 = vmatprep.subr.bf16.mxu0 0
    %545 = vmatpush2.bf16.msra.mxu0 0
    %546 = vmatprep.mubr.bf16.mxu0 0
    %547 = vmatmul.mubr.bf16.gmra.mxu0 %v328
    %v548 = vpop.f32.mrf.mxu0
    %v549 = vadd.f32 0.0, %v548
    %v550 = vpop.f32.mrf.mxu0
    %v551 = vpop.f32.mrf.mxu0
    %v552 = vpop.f32.mrf.mxu0
    %553 = vdwg.mxu0
    %v554 = vadd.f32 %v504, %v549
    %v555 = vtanh.pop %v554
    %v556 = vmul.f32 %v555, 0.1
    %v557 = vadd.f32 %v467, %v556
    %v558 = vld [vmem:[#allocation10] sm:$0xff]
    %v559 = vld [vmem:[#allocation10 + $0x8] sm:$0xff]
    %v560 = vld [vmem:[#allocation10 + $0x10] sm:$0xff]
    %v561 = vld [vmem:[#allocation10 + $0x18] sm:$0xff]
    %v562 = vld [vmem:[#allocation10 + $0x20] sm:$0xff]
    %v563 = vld [vmem:[#allocation10 + $0x28] sm:$0xff]
    %v564 = vld [vmem:[#allocation10 + $0x30] sm:$0xff]
    %v565 = vld [vmem:[#allocation10 + $0x38] sm:$0xff]
    %v566 = vld [vmem:[#allocation10 + $0x40] sm:$0xff]
    %v567 = vld [vmem:[#allocation10 + $0x48] sm:$0xff]
    %v568 = vld [vmem:[#allocation10 + $0x50] sm:$0xff]
    %v569 = vld [vmem:[#allocation10 + $0x58] sm:$0xff]
    %v570 = vld [vmem:[#allocation10 + $0x60] sm:$0xff]
    %v571 = vld [vmem:[#allocation10 + $0x68] sm:$0xff]
    %v572 = vld [vmem:[#allocation10 + $0x70] sm:$0xff]
    %v573 = vld [vmem:[#allocation10 + $0x78] sm:$0xff]
    %v574 = vld [vmem:[%s6] sm:$0x1]
    %v576 = vlaneseq
    %v577 = vshrl.u32 %v576, 7
    %v578 = vsub.s32 0, %v577
    %v579 = vrot.slane %v574, %v578
    %581 = vmatprep.subr.mxu0 0.0
    %582 = vmatpush1.msra.mxu0 %v573
    %583 = vmatprep.subr.mxu0 0.0
    %584 = vmatpush1.msra.mxu0 %v572
    %585 = vmatprep.subr.mxu0 0.0
    %586 = vmatpush1.msra.mxu0 %v571
    %587 = vmatprep.subr.mxu0 0.0
    %588 = vmatpush1.msra.mxu0 %v570
    %589 = vmatprep.subr.mxu0 0.0
    %590 = vmatpush1.msra.mxu0 %v569
    %591 = vmatprep.subr.mxu0 0.0
    %592 = vmatpush1.msra.mxu0 %v568
    %593 = vmatprep.subr.mxu0 0.0
    %594 = vmatpush1.msra.mxu0 %v567
    %595 = vmatprep.subr.mxu0 0.0
    %596 = vmatpush1.msra.mxu0 %v566
    %597 = vmatprep.subr.mxu0 0.0
    %598 = vmatpush1.msra.mxu0 %v565
    %599 = vmatprep.subr.mxu0 0.0
    %600 = vmatpush1.msra.mxu0 %v564
    %601 = vmatprep.subr.mxu0 0.0
    %602 = vmatpush1.msra.mxu0 %v563
    %603 = vmatprep.subr.mxu0 0.0
    %604 = vmatpush1.msra.mxu0 %v562
    %605 = vmatprep.subr.mxu0 0.0
    %606 = vmatpush1.msra.mxu0 %v561
    %607 = vmatprep.subr.mxu0 0.0
    %608 = vmatpush1.msra.mxu0 %v560
    %609 = vmatprep.subr.mxu0 0.0
    %610 = vmatpush1.msra.mxu0 %v559
    %611 = vmatprep.subr.mxu0 0.0
    %612 = vmatpush1.msra.mxu0 %v558
    %613 = vmatprep.subr.mxu0 0.0
    %614 = vmatpush2.msra.mxu0 0.0
    %615 = vmatprep.subr.mxu0 0.0
    %616 = vmatpush2.msra.mxu0 0.0
    %617 = vmatprep.subr.mxu0 0.0
    %618 = vmatpush2.msra.mxu0 0.0
    %619 = vmatprep.subr.mxu0 0.0
    %620 = vmatpush2.msra.mxu0 0.0
    %621 = vmatprep.subr.mxu0 0.0
    %622 = vmatpush2.msra.mxu0 0.0
    %623 = vmatprep.subr.mxu0 0.0
    %624 = vmatpush2.msra.mxu0 0.0
    %625 = vmatprep.subr.mxu0 0.0
    %626 = vmatpush2.msra.mxu0 0.0
    %627 = vmatprep.subr.mxu0 0.0
    %628 = vmatpush2.msra.mxu0 0.0
    %629 = vmatprep.subr.mxu0 0.0
    %630 = vmatpush2.msra.mxu0 0.0
    %631 = vmatprep.subr.mxu0 0.0
    %632 = vmatpush2.msra.mxu0 0.0
    %633 = vmatprep.subr.mxu0 0.0
    %634 = vmatpush2.msra.mxu0 0.0
    %635 = vmatprep.subr.mxu0 0.0
    %636 = vmatpush2.msra.mxu0 0.0
    %637 = vmatprep.subr.mxu0 0.0
    %638 = vmatpush2.msra.mxu0 0.0
    %639 = vmatprep.subr.mxu0 0.0
    %640 = vmatpush2.msra.mxu0 0.0
    %641 = vmatprep.subr.mxu0 0.0
    %642 = vmatpush2.msra.mxu0 0.0
    %643 = vmatprep.subr.mxu0 0.0
    %644 = vmatpush2.msra.mxu0 0.0
    %645 = vmatprep.mubr.f32.mxu0 0.0
    %646 = vmatmul.mubr.f32.gmra.mxu0 %v557
    %v647 = vpop.f32.mrf.mxu0
    %v648 = vadd.f32 %v579, %v647
    %v649 = vpop.f32.mrf.mxu0
    %650 = vdwg.mxu0
    %651 = vst [vmem:[#allocation11] sm:$0xff] %v648
    // Predicated region
    $region50: #{tpu_custom_call.1} parent=1 // pred_check
      _
    $region51: #{tpu_custom_call.1} parent=1 // pred_check_branch
      %653 = sbr.rel (0) target = $region53
    $region52: #{tpu_custom_call.1} parent=1 // pred_region
      %s655 = ssub.s32 128, 128
      %656 = vsyncadd [#allocation4], %s655
      %s658 = sshll.u32 [#allocation11], 4
      %s659 = int_to_ptr.vmem [resolvable:$true] %s658
      %661 = dma.vmem_to_hbm [thread:$0]  %s659, 128, %s7, [#allocation4]
    $region53: #{tpu_custom_call.1} parent=1 // pred_fallthru
      _
    // Predicated region
    $region54: #{tpu_custom_call.1} parent=1 // pred_check
      _
    $region55: #{tpu_custom_call.1} parent=1 // pred_check_branch
      %663 = sbr.rel (0) target = $region57
    $region56: #{tpu_custom_call.1} parent=1 // pred_region
      %664 = dma.done [#allocation4], 128
    $region57: #{tpu_custom_call.1} parent=1 // pred_fallthru
      _
    %665 = vsyncpa [#allocation3], 1
    %666 = vsyncpa [#allocation6], 1
    %667 = vsyncpa [#allocation9], 1
    %668 = vsyncpa [#allocation4], 1

</llo_original>
